<compile_context>
chip_gen: v6e
topology: v6e:2x2x1
jax: 0.10.0
libtpu: 0.0.40
codegen_flags: <defaults>
</compile_context>

<pallas_src>
import functools
import math

import jax
import jax.numpy as jnp
from jax.experimental import pallas as pl
from jax.experimental.pallas import tpu as pltpu


def timestep_embedder_kernel(t_ref, w1_ref, b1_ref, w2_ref, b2_ref, o_ref,
                             *, half, max_period):
    # t_ref:  (tb, 1)        f32
    # w1_ref: (2*half, H)    weight dtype (bf16 or f32)
    # b1_ref: (1, H)         f32
    # w2_ref: (H, tn)        weight dtype
    # b2_ref: (1, tn)        f32
    # o_ref:  (tb, tn)       out dtype
    t = t_ref[...]                                            # (tb, 1)

    # Frequency table generated in-kernel: iota + exp (EUP), no extra DMA.
    k = jax.lax.broadcasted_iota(jnp.int32, (1, half), 1).astype(jnp.float32)
    freqs = jnp.exp((-math.log(max_period) / half) * k)       # (1, half)

    args = t * freqs                                          # (tb, half)
    cos_e = jnp.cos(args)
    sin_e = jnp.sin(args)

    wdt = w1_ref.dtype
    # First linear in split-weight form: static, tile-aligned sub-views of the
    # full w1 (half is a multiple of 128 for the default config), so no
    # (tb, 2*half) lane-axis concat and no wrapper-side slicing/copy.
    h = (jnp.dot(cos_e.astype(wdt), w1_ref[:half, :],
                 preferred_element_type=jnp.float32)
         + jnp.dot(sin_e.astype(wdt), w1_ref[half:, :],
                   preferred_element_type=jnp.float32)
         + b1_ref[...])                                       # (tb, H) f32
    h = h * jax.nn.sigmoid(h)                                 # SiLU in f32

    out = jnp.dot(h.astype(w2_ref.dtype), w2_ref[...],
                  preferred_element_type=jnp.float32) + b2_ref[...]
    o_ref[...] = out.astype(o_ref.dtype)


def _device_info():
    """Returns (num_tensorcores, conservative scoped-VMEM budget, hard cap)."""
    try:
        kind = jax.devices()[0].device_kind.lower()
    except Exception:
        kind = ""
    if "v7" in kind:                                  # 2 TCs, 64 MiB physical
        return 2, 28 * 1024 * 1024, 48 * 1024 * 1024
    if "v5 lite" in kind or "v5e" in kind or "v5lite" in kind:
        return 1, 14 * 1024 * 1024, 100 * 1024 * 1024
    return 1, 28 * 1024 * 1024, 100 * 1024 * 1024     # v6e and other 1-TC


def _pick_tb(batch):
    """Largest sublane-friendly batch tile dividing `batch` (no >=2-tile rule)."""
    for c in (1024, 512, 256, 128, 64, 32, 16, 8):
        if batch % c == 0:
            return c
    return batch


def _pick_tn(hidden, freq, weight_bytes, tb, budget, force_split):
    """Largest lane-dense hidden-column tile whose working set fits `budget`.

    force_split (v7x with a single batch tile): start from hidden//2 so both
    TensorCores get one column tile each.
    """
    def est(tn):
        w1 = freq * hidden * weight_bytes
        w2 = hidden * tn * weight_bytes
        out = tb * tn * 4
        biases = (hidden + tn) * 4
        act = tb * (hidden + freq) * 4            # h + sin/cos intermediates
        # 2x for double-buffered pipelined operands, plus activation headroom.
        return 2 * (w1 + w2 + out + tb * 4 + biases) + 2 * act

    cands = [hidden]
    k = 2
    while k <= 8 and hidden % (k * 128) == 0:
        cands.append(hidden // k)
        k *= 2
    if force_split and len(cands) > 1:
        cands = cands[1:]
    for tn in cands:
        if est(tn) <= budget:
            return tn, est(tn)
    return cands[-1], est(cands[-1])


def timestep_embedder(t, params, frequency_embedding_size=256,
                      max_period=10000, out_dtype=None):
    """Pallas forward pass matching TimestepEmbedder.forward(t).

    params = (w1, b1, w2, b2) with w1: (freq, H), w2: (H, H) stored so the
    kernel computes x @ W + b (the transpose of nn.Linear.weight).  Weights
    may be bf16 (recommended); biases are used in f32.  Pass
    out_dtype=jnp.bfloat16 if the downstream conditioning path is bf16.
    """
    w1, b1, w2, b2 = params
    assert frequency_embedding_size % 2 == 0
    # TODO(synk): odd frequency_embedding_size would need the zero-pad column
    # branch (dim % 2); the default config (256) is even.
    B = t.shape[0]
    hidden = w2.shape[1]
    half = frequency_embedding_size // 2
    assert w1.shape == (frequency_embedding_size, hidden)
    out_dtype = jnp.float32 if out_dtype is None else out_dtype

    num_tc, budget, vmem_cap = _device_info()

    t2d = t.astype(jnp.float32).reshape(B, 1)
    b1_2d = b1.reshape(1, hidden).astype(jnp.float32)
    b2_2d = b2.reshape(1, hidden).astype(jnp.float32)

    tb = _pick_tb(B)
    b_tiles = B // tb
    # Only split the hidden columns when (a) v7x needs a second core's worth
    # of work and the batch doesn't provide it, or (b) full-w2 double
    # buffering would blow the scoped-VMEM budget.
    force_split = (num_tc == 2 and b_tiles < 2)
    tn, est = _pick_tn(hidden, frequency_embedding_size, w1.dtype.itemsize,
                       tb, budget, force_split)
    n_tiles = hidden // tn

    # Grid: N outer, B inner.  w2/b2 block indices are constant across the
    # inner batch loop, so each column tile of w2 is DMA'd exactly once per
    # call; with n_tiles == 1 (the common case) every weight is DMA'd once.
    grid = (n_tiles, b_tiles)

    compiler_kwargs = dict(dimension_semantics=("parallel", "parallel"))
    if est > budget:
        compiler_kwargs["vmem_limit_bytes"] = min(int(est * 1.25), vmem_cap)

    kernel = functools.partial(timestep_embedder_kernel,
                               half=half, max_period=max_period)

    return pl.pallas_call(
        kernel,
        out_shape=jax.ShapeDtypeStruct((B, hidden), out_dtype),
        grid_spec=pltpu.PrefetchScalarGridSpec(
            num_scalar_prefetch=0,
            grid=grid,
            in_specs=[
                pl.BlockSpec((tb, 1), lambda j, i: (i, 0)),                   # t
                pl.BlockSpec((frequency_embedding_size, hidden),
                             lambda j, i: (0, 0)),                            # w1
                pl.BlockSpec((1, hidden), lambda j, i: (0, 0)),               # b1
                pl.BlockSpec((hidden, tn), lambda j, i: (0, j)),              # w2
                pl.BlockSpec((1, tn), lambda j, i: (0, j)),                   # b2
            ],
            out_specs=pl.BlockSpec((tb, tn), lambda j, i: (i, j)),
        ),
        compiler_params=pltpu.CompilerParams(**compiler_kwargs),
    )(t2d, w1, b1_2d, w2, b2_2d)


def _reference(t, params, frequency_embedding_size=256, max_period=10000):
    """Pure-JAX reference with the same mixed-precision policy as the kernel."""
    w1, b1, w2, b2 = params
    half = frequency_embedding_size // 2
    freqs = jnp.exp(
        -math.log(max_period) * jnp.arange(half, dtype=jnp.float32) / half)
    args = t.astype(jnp.float32)[:, None] * freqs[None]
    emb = jnp.concatenate([jnp.cos(args), jnp.sin(args)], axis=-1)
    wdt = w1.dtype
    h = jnp.dot(emb.astype(wdt), w1, preferred_element_type=jnp.float32) \
        + b1.astype(jnp.float32)
    h = h * jax.nn.sigmoid(h)
    out = jnp.dot(h.astype(w2.dtype), w2, preferred_element_type=jnp.float32) \
        + b2.astype(jnp.float32)
    return out


if __name__ == "__main__":
    key = jax.random.PRNGKey(0)
    B = 8
    hidden_size = 32
    freq_dim = 256

    k_t, k_w1, k_b1, k_w2, k_b2 = jax.random.split(key, 5)
    # Deterministic synthetic parameters (shapes per nn.Linear in __init__,
    # stored as (in, out)).  Weights in bf16 (perf), biases in f32.
    w1 = (jax.random.normal(k_w1, (freq_dim, hidden_size), jnp.float32)
          * 0.02).astype(jnp.bfloat16)
    b1 = jax.random.normal(k_b1, (hidden_size,), jnp.float32) * 0.02
    w2 = (jax.random.normal(k_w2, (hidden_size, hidden_size), jnp.float32)
          * 0.02).astype(jnp.bfloat16)
    b2 = jax.random.normal(k_b2, (hidden_size,), jnp.float32) * 0.02
    params = (w1, b1, w2, b2)

    t = jax.random.uniform(k_t, (B,), jnp.float32, minval=0.0, maxval=1000.0)

    out = timestep_embedder(t, params, frequency_embedding_size=freq_dim)
    out = jax.block_until_ready(out)

    ref = _reference(t, params, frequency_embedding_size=freq_dim)
    assert out.shape == (B, hidden_size)
    assert jnp.allclose(out, ref, atol=2e-3, rtol=1e-2), (
        float(jnp.max(jnp.abs(out - ref))))
    print("KERNEL_OK")
</pallas_src>

<mosaic_0001>
module attributes {stable_mosaic.version = 11 : i64} {
  func.func @timestep_embedder_kernel(%arg0: i32, %arg1: i32, %arg2: memref<8x1xf32, #tpu.memory_space<vmem>>, %arg3: memref<256x32xbf16, #tpu.memory_space<vmem>>, %arg4: memref<1x32xf32, #tpu.memory_space<vmem>>, %arg5: memref<32x32xbf16, #tpu.memory_space<vmem>>, %arg6: memref<1x32xf32, #tpu.memory_space<vmem>>, %arg7: memref<8x32xf32, #tpu.memory_space<vmem>>) attributes {dimension_semantics = [#tpu.dimension_semantics<parallel>, #tpu.dimension_semantics<parallel>], iteration_bounds = array<i64: 1, 1>, scalar_prefetch = 0 : i64, scratch_operands = 0 : i64, tpu.core_type = #tpu.core_type<tc>, window_params = [{transform_indices = @transform_0, window_bounds = array<i64: 8, 1>}, {pipeline_mode = #tpu.pipeline_mode<synchronous>, transform_indices = @transform_1, window_bounds = array<i64: 256, 32>}, {pipeline_mode = #tpu.pipeline_mode<synchronous>, transform_indices = @transform_2, window_bounds = array<i64: 1, 32>}, {transform_indices = @transform_3, window_bounds = array<i64: 32, 32>}, {transform_indices = @transform_4, window_bounds = array<i64: 1, 32>}, {transform_indices = @transform_5, window_bounds = array<i64: 8, 32>}]} {
    %c0 = arith.constant 0 : index
    %c0_0 = arith.constant 0 : index
    %0 = vector.load %arg2[%c0, %c0_0] : memref<8x1xf32, #tpu.memory_space<vmem>>, vector<8x1xf32>
    %1 = tpu.iota {dimensions = array<i32: 1>} : vector<1x128xi32>
    %2 = arith.sitofp %1 : vector<1x128xi32> to vector<1x128xf32>
    %cst = arith.constant -0.0719557852 : f32
    %3 = vector.broadcast %cst : f32 to vector<1x128xf32>
    %4 = arith.mulf %3, %2 : vector<1x128xf32>
    %5 = math.exp %4 : vector<1x128xf32>
    %6 = vector.broadcast %0 : vector<8x1xf32> to vector<8x128xf32>
    %7 = vector.broadcast %5 : vector<1x128xf32> to vector<8x128xf32>
    %8 = arith.mulf %6, %7 : vector<8x128xf32>
    %9 = math.cos %8 : vector<8x128xf32>
    %10 = math.sin %8 : vector<8x128xf32>
    %11 = arith.truncf %9 : vector<8x128xf32> to vector<8x128xbf16>
    %c0_1 = arith.constant 0 : index
    %c0_2 = arith.constant 0 : index
    %12 = vector.load %arg3[%c0_1, %c0_2] : memref<256x32xbf16, #tpu.memory_space<vmem>>, vector<128x32xbf16>
    %cst_3 = arith.constant dense<0.000000e+00> : vector<8x32xf32>
    %13 = tpu.matmul %11, %12, %cst_3 {dimension_numbers = #tpu.dot_dimension_numbers<[1], [0], [0], [1], [0, 0, 1, 1], [], []>} : vector<8x128xbf16>, vector<128x32xbf16>, vector<8x32xf32> -> vector<8x32xf32>
    %14 = arith.truncf %10 : vector<8x128xf32> to vector<8x128xbf16>
    %c128 = arith.constant 128 : index
    %c0_4 = arith.constant 0 : index
    %15 = vector.load %arg3[%c128, %c0_4] : memref<256x32xbf16, #tpu.memory_space<vmem>>, vector<128x32xbf16>
    %cst_5 = arith.constant dense<0.000000e+00> : vector<8x32xf32>
    %16 = tpu.matmul %14, %15, %cst_5 {dimension_numbers = #tpu.dot_dimension_numbers<[1], [0], [0], [1], [0, 0, 1, 1], [], []>} : vector<8x128xbf16>, vector<128x32xbf16>, vector<8x32xf32> -> vector<8x32xf32>
    %17 = arith.addf %13, %16 : vector<8x32xf32>
    %c0_6 = arith.constant 0 : index
    %c0_7 = arith.constant 0 : index
    %18 = vector.load %arg4[%c0_6, %c0_7] : memref<1x32xf32, #tpu.memory_space<vmem>>, vector<1x32xf32>
    %19 = vector.broadcast %18 : vector<1x32xf32> to vector<8x32xf32>
    %20 = arith.addf %17, %19 : vector<8x32xf32>
    %21 = arith.negf %20 : vector<8x32xf32>
    %22 = math.exp %21 : vector<8x32xf32>
    %cst_8 = arith.constant 1.000000e+00 : f32
    %23 = vector.broadcast %cst_8 : f32 to vector<8x32xf32>
    %24 = arith.addf %23, %22 : vector<8x32xf32>
    %25 = arith.divf %23, %24 : vector<8x32xf32>
    %26 = arith.mulf %20, %25 : vector<8x32xf32>
    %27 = arith.truncf %26 : vector<8x32xf32> to vector<8x32xbf16>
    %c0_9 = arith.constant 0 : index
    %c0_10 = arith.constant 0 : index
    %28 = vector.load %arg5[%c0_9, %c0_10] : memref<32x32xbf16, #tpu.memory_space<vmem>>, vector<32x32xbf16>
    %cst_11 = arith.constant dense<0.000000e+00> : vector<8x32xf32>
    %29 = tpu.matmul %27, %28, %cst_11 {dimension_numbers = #tpu.dot_dimension_numbers<[1], [0], [0], [1], [0, 0, 1, 1], [], []>} : vector<8x32xbf16>, vector<32x32xbf16>, vector<8x32xf32> -> vector<8x32xf32>
    %c0_12 = arith.constant 0 : index
    %c0_13 = arith.constant 0 : index
    %30 = vector.load %arg6[%c0_12, %c0_13] : memref<1x32xf32, #tpu.memory_space<vmem>>, vector<1x32xf32>
    %31 = vector.broadcast %30 : vector<1x32xf32> to vector<8x32xf32>
    %32 = arith.addf %29, %31 : vector<8x32xf32>
    %c0_14 = arith.constant 0 : index
    %c0_15 = arith.constant 0 : index
    %33 = vector.load %arg7[%c0_14, %c0_15] : memref<8x32xf32, #tpu.memory_space<vmem>>, vector<8x32xf32>
    tpu.vector_store %arg7[%c0_14, %c0_15], %32 {strides = array<i32>} : memref<8x32xf32, #tpu.memory_space<vmem>>, vector<8x32xf32>,
    return
  }
  func.func @transform_0(%arg0: i32, %arg1: i32) -> (i32, i32) {
    %c0_i32 = arith.constant 0 : i32
    %c0_i32_0 = arith.constant 0 : i32
    return %arg1, %c0_i32 : i32, i32
  }
  func.func @transform_1(%arg0: i32, %arg1: i32) -> (i32, i32) {
    %c0_i32 = arith.constant 0 : i32
    %c0_i32_0 = arith.constant 0 : i32
    %c0_i32_1 = arith.constant 0 : i32
    return %c0_i32, %c0_i32_0 : i32, i32
  }
  func.func @transform_2(%arg0: i32, %arg1: i32) -> (i32, i32) {
    %c0_i32 = arith.constant 0 : i32
    %c0_i32_0 = arith.constant 0 : i32
    %c0_i32_1 = arith.constant 0 : i32
    return %c0_i32, %c0_i32_0 : i32, i32
  }
  func.func @transform_3(%arg0: i32, %arg1: i32) -> (i32, i32) {
    %c0_i32 = arith.constant 0 : i32
    %c0_i32_0 = arith.constant 0 : i32
    return %c0_i32, %arg0 : i32, i32
  }
  func.func @transform_4(%arg0: i32, %arg1: i32) -> (i32, i32) {
    %c0_i32 = arith.constant 0 : i32
    %c0_i32_0 = arith.constant 0 : i32
    return %c0_i32, %arg0 : i32, i32
  }
  func.func @transform_5(%arg0: i32, %arg1: i32) -> (i32, i32) {
    %c0_i32 = arith.constant 0 : i32
    return %arg1, %arg0 : i32, i32
  }
}

</mosaic_0001>

<llo_original>
// kernel: tpu_custom_call.1
$region0: #{tpu_custom_call.1}
  #allocation0 [shape = 'u32[]', space=smem, size = 0x4, offset = 0x4, fixed_abs, tag = 'smem constant byte address 0x4 - core index']
  #allocation1 [shape = 'u32[144,128]{1,0:T(1,128)}', space=vmem, size = 0x12000, scoped, tag = 'internal scratch']
  %s0 = inlined_call_operand.vmem [shape: f32[8,1], index: 0, kind: input, shape index: {}]
  %s1 = inlined_call_operand.vmem [shape: bf16[256,32], index: 1, kind: input, shape index: {}]
  %s2 = inlined_call_operand.vmem [shape: f32[1,32], index: 2, kind: input, shape index: {}]
  %s3 = inlined_call_operand.vmem [shape: bf16[32,32], index: 3, kind: input, shape index: {}]
  %s4 = inlined_call_operand.vmem [shape: f32[1,32], index: 4, kind: input, shape index: {}]
  %s5 = inlined_call_operand.hbm [shape: f32[8,32], index: 5, kind: output, shape index: {}]
  %s6 = sld [smem:[#allocation0]]
  $region30: #{tpu_custom_call.1} parent=0
    _
  %s8 = ssub.s32 1, %s6
  %s9 = scalar_select 0, %s8, %s6
  $region1: #{tpu_custom_call.1} parent=0
    #allocation2 [shape = 'u8[4096]{0}', space=vmem, size = 0x1000, scoped, tag = 'output window, operand 0, single buffered']
    #allocation3 [shape = 's32[1]{0}', space=sflag, size = 0x4, scoped, tag = 'scoped memory for tpu_custom_call.1']
    %10 = vsyncpa [#allocation3], 0
    // Predicated region
    $region2: #{tpu_custom_call.1} parent=1 // pred_check
      _
    $region3: #{tpu_custom_call.1} parent=1 // pred_check_branch
      %12 = sbr.rel (0) target = $region5
    $region4: #{tpu_custom_call.1} parent=1 // pred_region
      _
    $region5: #{tpu_custom_call.1} parent=1 // pred_fallthru
      _
    // Predicated region
    $region6: #{tpu_custom_call.1} parent=1 // pred_check
      _
    $region7: #{tpu_custom_call.1} parent=1 // pred_check_branch
      %14 = sbr.rel (0) target = $region9
    $region8: #{tpu_custom_call.1} parent=1 // pred_region
      _
    $region9: #{tpu_custom_call.1} parent=1 // pred_fallthru
      _
    // Predicated region
    $region10: #{tpu_custom_call.1} parent=1 // pred_check
      _
    $region11: #{tpu_custom_call.1} parent=1 // pred_check_branch
      %16 = sbr.rel (0) target = $region13
    $region12: #{tpu_custom_call.1} parent=1 // pred_region
      _
    $region13: #{tpu_custom_call.1} parent=1 // pred_fallthru
      _
    // Predicated region
    $region14: #{tpu_custom_call.1} parent=1 // pred_check
      _
    $region15: #{tpu_custom_call.1} parent=1 // pred_check_branch
      %18 = sbr.rel (0) target = $region17
    $region16: #{tpu_custom_call.1} parent=1 // pred_region
      _
    $region17: #{tpu_custom_call.1} parent=1 // pred_fallthru
      _
    // Predicated region
    $region18: #{tpu_custom_call.1} parent=1 // pred_check
      _
    $region19: #{tpu_custom_call.1} parent=1 // pred_check_branch
      %20 = sbr.rel (0) target = $region21
    $region20: #{tpu_custom_call.1} parent=1 // pred_region
      _
    $region21: #{tpu_custom_call.1} parent=1 // pred_fallthru
      _
    %v22 = vld [vmem:[%s0] sm:$0xff]
    %v23 = vlaneseq
    %v24 = vand.u32 %v23, 127
    %v25 = vcvt.s32.f32 %v24
    %v26 = vmul.f32 %v25, -0.071955785
    %v27 = vmul.f32 %v26, 1.442695
    %v28 = vpow.pop %v27
    %30 = vset.pattern.permute.xlu0 0
    %31 = vperm.xlu0 %30, %v22
    %v32 = vpop.permute.xlu0 %31
    %v34 = vmul.f32 %v32, %v28
    %v35 = vand.u32 2147483647, %v34
    %vm36 = vcmp.le.f32.partialorder %v35, 0.7853982
    %vm37 = vcmp.lt.s32.totalorder %v34, 0
    %v38 = vand.u32 %v34, 2139095040
    %v39 = vshrl.u32 %v38, 23
    %v40 = vsub.s32 %v39, 127
    %v41 = vand.u32 2147483647, %v34
    %v42 = vand.u32 %v41, 8388607
    %v43 = vor.u32 %v42, 8388608
    %v44 = vsub.s32 0, %v43
    %v45 = vadd.s32 %v40, 1
    %vm46 = vcmp.gt.s32.totalorder %v45, 0
    %v47 = vsel %vm46, %v45, 0
    %v48 = vshrl.u32 %v47, 5
    %v49 = vand.u32 %v47, 31
    %v50 = vsub.s32 32, %v49
    %v51 = vshrl.u32 683565275, %v50
    %v52 = vshll.u32 683565275, %v49
    %v53 = vshrl.u32 2475754826, %v50
    %v54 = vor.u32 %v52, %v53
    %v55 = vshll.u32 2475754826, %v49
    %v56 = vshrl.u32 2131351028, %v50
    %v57 = vor.u32 %v55, %v56
    %v58 = vshll.u32 2131351028, %v49
    %v59 = vshrl.u32 2102212464, %v50
    %v60 = vor.u32 %v58, %v59
    %v61 = vshll.u32 2102212464, %v49
    %v62 = vshrl.u32 920167782, %v50
    %v63 = vor.u32 %v61, %v62
    %v64 = vshll.u32 920167782, %v49
    %v65 = vshrl.u32 1326507024, %v50
    %v66 = vor.u32 %v64, %v65
    %vm67 = vcmp.lt.s32.totalorder %v48, 1
    %vm68 = vcmp.lt.s32.totalorder %v48, 2
    %vm69 = vcmp.lt.s32.totalorder %v48, 3
    %vm70 = vcmp.lt.s32.totalorder %v48, 4
    %v71 = vsel %vm67, %v51, %v54
    %v72 = vsel %vm70, %v60, 2102212464
    %v73 = vsel %vm69, %v57, %v72
    %v74 = vsel %vm68, %v71, %v73
    %v75 = vsel %vm67, %v54, %v57
    %v76 = vsel %vm70, %v63, 920167782
    %v77 = vsel %vm69, %v60, %v76
    %v78 = vsel %vm68, %v75, %v77
    %v79 = vsel %vm67, %v57, %v60
    %v80 = vsel %vm70, %v66, 1326507024
    %v81 = vsel %vm69, %v63, %v80
    %v82 = vsel %vm68, %v79, %v81
    %v83 = vshll.u32 %v43, 8
    %v84 = vmul.u32.u64.compose %v83, %v82
    %v85 = vextract.low.u32 %v84
    %v86 = vextract.high.u32 %v84
    %v87 = vmul.u32.u64.compose %v83, %v78
    %v88 = vextract.low.u32 %v87
    %v89 = vextract.high.u32 %v87
    %v90 = vmul.u32 %v83, %v74
    %v91 = vadd.s32 %v86, %v88
    %vm92 = vc.u32 %v86, %v88
    %v93 = vadd.s32 %v89, 1
    %v94 = vsel %vm92, %v93, %v89
    %v95 = vadd.s32 %v90, %v94
    %v96 = vadd.s32 %v95, 536870912
    %v97 = vshrl.u32 %v96, 30
    %v98 = vshll.u32 %v97, 30
    %v99 = vsub.s32 %v95, %v98
    %vm100 = vcmp.lt.s32.totalorder %v99, 0
    %v101 = vsub.s32 0, %v99
    %v102 = vsel %vm100, %v101, %v99
    %v103 = vclz %v102
    %v104 = vsub.s32 %v103, 2
    %vm105 = vcmp.gt.s32.totalorder 0, %v104
    %v106 = vsel %vm105, 0, %v104
    %v107 = vsub.s32 32, %v106
    %v108 = vshll.u32 %v99, %v106
    %v109 = vshrl.u32 %v91, %v107
    %v110 = vor.u32 %v108, %v109
    %v111 = vsub.s32 4294967266, %v106
    %v112 = vadd.s32 %v111, 127
    %v113 = vshll.u32 %v112, 23
    %v114 = vor.u32 4788187, %v113
    %v115 = vand.u32 2147483647, %v114
    %v117 = vcvt.s32.f32 %v110
    %v118 = vmul.f32 %v117, %v115
    %v119 = vxor.u32 %v118, 2147483648
    %v120 = vsel %vm37, %v119, %v118
    %v121 = vsub.s32 4, %v97
    %v122 = vsel %vm37, %v121, %v97
    %v123 = vsel %vm36, %v34, %v120
    %v124 = vsel %vm36, 0, %v122
    %v125 = vcosq.f32.pop %v123
    %v126 = vsinq.f32.pop %v123
    %vm127 = vweird.f32 %v34
    %v128 = vand.u32 %v124, 3
    %vm129 = vcmp.lt.s32.totalorder %v128, 2
    %vm130 = vcmp.eq.s32.totalorder %v128, 0
    %v131 = vxor.u32 %v126, 2147483648
    %v132 = vsel %vm130, %v125, %v131
    %vm133 = vcmp.eq.s32.totalorder %v128, 2
    %v134 = vxor.u32 %v125, 2147483648
    %v135 = vsel %vm133, %v134, %v126
    %v136 = vsel %vm129, %v132, %v135
    %v137 = vsel %vm127, nan, %v136
    %v138 = vand.u32 2147483647, %v34
    %vm139 = vcmp.le.f32.partialorder %v138, 0.7853982
    %vm140 = vcmp.lt.s32.totalorder %v34, 0
    %v141 = vand.u32 %v34, 2139095040
    %v142 = vshrl.u32 %v141, 23
    %v143 = vsub.s32 %v142, 127
    %v144 = vand.u32 2147483647, %v34
    %v145 = vand.u32 %v144, 8388607
    %v146 = vor.u32 %v145, 8388608
    %v147 = vsub.s32 0, %v146
    %v148 = vadd.s32 %v143, 1
    %vm149 = vcmp.gt.s32.totalorder %v148, 0
    %v150 = vsel %vm149, %v148, 0
    %v151 = vshrl.u32 %v150, 5
    %v152 = vand.u32 %v150, 31
    %v153 = vsub.s32 32, %v152
    %v154 = vshrl.u32 683565275, %v153
    %v155 = vshll.u32 683565275, %v152
    %v156 = vshrl.u32 2475754826, %v153
    %v157 = vor.u32 %v155, %v156
    %v158 = vshll.u32 2475754826, %v152
    %v159 = vshrl.u32 2131351028, %v153
    %v160 = vor.u32 %v158, %v159
    %v161 = vshll.u32 2131351028, %v152
    %v162 = vshrl.u32 2102212464, %v153
    %v163 = vor.u32 %v161, %v162
    %v164 = vshll.u32 2102212464, %v152
    %v165 = vshrl.u32 920167782, %v153
    %v166 = vor.u32 %v164, %v165
    %v167 = vshll.u32 920167782, %v152
    %v168 = vshrl.u32 1326507024, %v153
    %v169 = vor.u32 %v167, %v168
    %vm170 = vcmp.lt.s32.totalorder %v151, 1
    %vm171 = vcmp.lt.s32.totalorder %v151, 2
    %vm172 = vcmp.lt.s32.totalorder %v151, 3
    %vm173 = vcmp.lt.s32.totalorder %v151, 4
    %v174 = vsel %vm170, %v154, %v157
    %v175 = vsel %vm173, %v163, 2102212464
    %v176 = vsel %vm172, %v160, %v175
    %v177 = vsel %vm171, %v174, %v176
    %v178 = vsel %vm170, %v157, %v160
    %v179 = vsel %vm173, %v166, 920167782
    %v180 = vsel %vm172, %v163, %v179
    %v181 = vsel %vm171, %v178, %v180
    %v182 = vsel %vm170, %v160, %v163
    %v183 = vsel %vm173, %v169, 1326507024
    %v184 = vsel %vm172, %v166, %v183
    %v185 = vsel %vm171, %v182, %v184
    %v186 = vshll.u32 %v146, 8
    %v187 = vmul.u32.u64.compose %v186, %v185
    %v188 = vextract.low.u32 %v187
    %v189 = vextract.high.u32 %v187
    %v190 = vmul.u32.u64.compose %v186, %v181
    %v191 = vextract.low.u32 %v190
    %v192 = vextract.high.u32 %v190
    %v193 = vmul.u32 %v186, %v177
    %v194 = vadd.s32 %v189, %v191
    %vm195 = vc.u32 %v189, %v191
    %v196 = vadd.s32 %v192, 1
    %v197 = vsel %vm195, %v196, %v192
    %v198 = vadd.s32 %v193, %v197
    %v199 = vadd.s32 %v198, 536870912
    %v200 = vshrl.u32 %v199, 30
    %v201 = vshll.u32 %v200, 30
    %v202 = vsub.s32 %v198, %v201
    %vm203 = vcmp.lt.s32.totalorder %v202, 0
    %v204 = vsub.s32 0, %v202
    %v205 = vsel %vm203, %v204, %v202
    %v206 = vclz %v205
    %v207 = vsub.s32 %v206, 2
    %vm208 = vcmp.gt.s32.totalorder 0, %v207
    %v209 = vsel %vm208, 0, %v207
    %v210 = vsub.s32 32, %v209
    %v211 = vshll.u32 %v202, %v209
    %v212 = vshrl.u32 %v194, %v210
    %v213 = vor.u32 %v211, %v212
    %v214 = vsub.s32 4294967266, %v209
    %v215 = vadd.s32 %v214, 127
    %v216 = vshll.u32 %v215, 23
    %v217 = vor.u32 4788187, %v216
    %v218 = vand.u32 2147483647, %v217
    %v220 = vcvt.s32.f32 %v213
    %v221 = vmul.f32 %v220, %v218
    %v222 = vxor.u32 %v221, 2147483648
    %v223 = vsel %vm140, %v222, %v221
    %v224 = vsub.s32 4, %v200
    %v225 = vsel %vm140, %v224, %v200
    %v226 = vsel %vm139, %v34, %v223
    %v227 = vsel %vm139, 0, %v225
    %v228 = vcosq.f32.pop %v226
    %v229 = vsinq.f32.pop %v226
    %vm230 = vweird.f32 %v34
    %v231 = vadd.s32 %v227, 3
    %v232 = vand.u32 %v231, 3
    %vm233 = vcmp.lt.s32.totalorder %v232, 2
    %vm234 = vcmp.eq.s32.totalorder %v232, 0
    %v235 = vxor.u32 %v229, 2147483648
    %v236 = vsel %vm234, %v228, %v235
    %vm237 = vcmp.eq.s32.totalorder %v232, 2
    %v238 = vxor.u32 %v228, 2147483648
    %v239 = vsel %vm237, %v238, %v229
    %v240 = vsel %vm233, %v236, %v239
    %v241 = vsel %vm230, nan, %v240
    %v242 = vpack.c.bf16 %v137, %v137
    %v243 = vld [vmem:[%s1] sm:$0xf]
    %v244 = vld [vmem:[%s1 + $0x4] sm:$0xf]
    %v245 = vld [vmem:[%s1 + $0x8] sm:$0xf]
    %v246 = vld [vmem:[%s1 + $0xc] sm:$0xf]
    %v247 = vld [vmem:[%s1 + $0x10] sm:$0xf]
    %v248 = vld [vmem:[%s1 + $0x14] sm:$0xf]
    %v249 = vld [vmem:[%s1 + $0x18] sm:$0xf]
    %v250 = vld [vmem:[%s1 + $0x1c] sm:$0xf]
    %v251 = vld [vmem:[%s1 + $0x20] sm:$0xf]
    %v252 = vld [vmem:[%s1 + $0x24] sm:$0xf]
    %v253 = vld [vmem:[%s1 + $0x28] sm:$0xf]
    %v254 = vld [vmem:[%s1 + $0x2c] sm:$0xf]
    %v255 = vld [vmem:[%s1 + $0x30] sm:$0xf]
    %v256 = vld [vmem:[%s1 + $0x34] sm:$0xf]
    %v257 = vld [vmem:[%s1 + $0x38] sm:$0xf]
    %v258 = vld [vmem:[%s1 + $0x3c] sm:$0xf]
    %v259 = vpack.c.bf16 %v241, %v241
    %v260 = vld [vmem:[%s1 + $0x40] sm:$0xf]
    %v261 = vld [vmem:[%s1 + $0x44] sm:$0xf]
    %v262 = vld [vmem:[%s1 + $0x48] sm:$0xf]
    %v263 = vld [vmem:[%s1 + $0x4c] sm:$0xf]
    %v264 = vld [vmem:[%s1 + $0x50] sm:$0xf]
    %v265 = vld [vmem:[%s1 + $0x54] sm:$0xf]
    %v266 = vld [vmem:[%s1 + $0x58] sm:$0xf]
    %v267 = vld [vmem:[%s1 + $0x5c] sm:$0xf]
    %v268 = vld [vmem:[%s1 + $0x60] sm:$0xf]
    %v269 = vld [vmem:[%s1 + $0x64] sm:$0xf]
    %v270 = vld [vmem:[%s1 + $0x68] sm:$0xf]
    %v271 = vld [vmem:[%s1 + $0x6c] sm:$0xf]
    %v272 = vld [vmem:[%s1 + $0x70] sm:$0xf]
    %v273 = vld [vmem:[%s1 + $0x74] sm:$0xf]
    %v274 = vld [vmem:[%s1 + $0x78] sm:$0xf]
    %v275 = vld [vmem:[%s1 + $0x7c] sm:$0xf]
    %v292 = vunpack.c.l.b16 %v260
    %v293 = vunpack.c.l.b16 %v261
    %v294 = vunpack.c.l.b16 %v262
    %v295 = vunpack.c.l.b16 %v263
    %v296 = vunpack.c.l.b16 %v264
    %v297 = vunpack.c.l.b16 %v265
    %v298 = vunpack.c.l.b16 %v266
    %v299 = vunpack.c.l.b16 %v267
    %v300 = vunpack.c.l.b16 %v268
    %v301 = vunpack.c.l.b16 %v269
    %v302 = vunpack.c.l.b16 %v270
    %v303 = vunpack.c.l.b16 %v271
    %v304 = vunpack.c.l.b16 %v272
    %v305 = vunpack.c.l.b16 %v273
    %v306 = vunpack.c.l.b16 %v274
    %v307 = vunpack.c.l.b16 %v275
    %v308 = vpack.c.b16 %v293, %v292
    %v309 = vpack.c.b16 %v295, %v294
    %v310 = vpack.c.b16 %v297, %v296
    %v311 = vpack.c.b16 %v299, %v298
    %v312 = vpack.c.b16 %v301, %v300
    %v313 = vpack.c.b16 %v303, %v302
    %v314 = vpack.c.b16 %v305, %v304
    %v315 = vpack.c.b16 %v307, %v306
    %324 = vmatprep.subr.bf16.mxu0 0
    %325 = vmatpush1.bf16.msra.mxu0 %v315
    %326 = vmatprep.subr.bf16.mxu0 0
    %327 = vmatpush1.bf16.msra.mxu0 %v314
    %328 = vmatprep.subr.bf16.mxu0 0
    %329 = vmatpush1.bf16.msra.mxu0 %v313
    %330 = vmatprep.subr.bf16.mxu0 0
    %331 = vmatpush1.bf16.msra.mxu0 %v312
    %332 = vmatprep.subr.bf16.mxu0 0
    %333 = vmatpush1.bf16.msra.mxu0 %v311
    %334 = vmatprep.subr.bf16.mxu0 0
    %335 = vmatpush1.bf16.msra.mxu0 %v310
    %336 = vmatprep.subr.bf16.mxu0 0
    %337 = vmatpush1.bf16.msra.mxu0 %v309
    %338 = vmatprep.subr.bf16.mxu0 0
    %339 = vmatpush1.bf16.msra.mxu0 %v308
    %340 = vmatprep.subr.bf16.mxu0 0
    %341 = vmatpush2.bf16.msra.mxu0 0
    %342 = vmatprep.subr.bf16.mxu0 0
    %343 = vmatpush2.bf16.msra.mxu0 0
    %344 = vmatprep.subr.bf16.mxu0 0
    %345 = vmatpush2.bf16.msra.mxu0 0
    %346 = vmatprep.subr.bf16.mxu0 0
    %347 = vmatpush2.bf16.msra.mxu0 0
    %348 = vmatprep.subr.bf16.mxu0 0
    %349 = vmatpush2.bf16.msra.mxu0 0
    %350 = vmatprep.subr.bf16.mxu0 0
    %351 = vmatpush2.bf16.msra.mxu0 0
    %352 = vmatprep.subr.bf16.mxu0 0
    %353 = vmatpush2.bf16.msra.mxu0 0
    %354 = vmatprep.subr.bf16.mxu0 0
    %355 = vmatpush2.bf16.msra.mxu0 0
    %356 = vmatprep.mubr.bf16.mxu0 0
    %357 = vmatmul.mubr.bf16.gmra.mxu0 %v259
    %v358 = vpop.f32.mrf.mxu0
    %v359 = vadd.f32 0.0, %v358
    %v360 = vpop.f32.mrf.mxu0
    %v361 = vpop.f32.mrf.mxu0
    %v362 = vpop.f32.mrf.mxu0
    %363 = vdwg.mxu0
    %v380 = vunpack.c.l.b16 %v243
    %v381 = vunpack.c.l.b16 %v244
    %v382 = vunpack.c.l.b16 %v245
    %v383 = vunpack.c.l.b16 %v246
    %v384 = vunpack.c.l.b16 %v247
    %v385 = vunpack.c.l.b16 %v248
    %v386 = vunpack.c.l.b16 %v249
    %v387 = vunpack.c.l.b16 %v250
    %v388 = vunpack.c.l.b16 %v251
    %v389 = vunpack.c.l.b16 %v252
    %v390 = vunpack.c.l.b16 %v253
    %v391 = vunpack.c.l.b16 %v254
    %v392 = vunpack.c.l.b16 %v255
    %v393 = vunpack.c.l.b16 %v256
    %v394 = vunpack.c.l.b16 %v257
    %v395 = vunpack.c.l.b16 %v258
    %v396 = vpack.c.b16 %v381, %v380
    %v397 = vpack.c.b16 %v383, %v382
    %v398 = vpack.c.b16 %v385, %v384
    %v399 = vpack.c.b16 %v387, %v386
    %v400 = vpack.c.b16 %v389, %v388
    %v401 = vpack.c.b16 %v391, %v390
    %v402 = vpack.c.b16 %v393, %v392
    %v403 = vpack.c.b16 %v395, %v394
    %412 = vmatprep.subr.bf16.mxu0 0
    %413 = vmatpush1.bf16.msra.mxu0 %v403
    %414 = vmatprep.subr.bf16.mxu0 0
    %415 = vmatpush1.bf16.msra.mxu0 %v402
    %416 = vmatprep.subr.bf16.mxu0 0
    %417 = vmatpush1.bf16.msra.mxu0 %v401
    %418 = vmatprep.subr.bf16.mxu0 0
    %419 = vmatpush1.bf16.msra.mxu0 %v400
    %420 = vmatprep.subr.bf16.mxu0 0
    %421 = vmatpush1.bf16.msra.mxu0 %v399
    %422 = vmatprep.subr.bf16.mxu0 0
    %423 = vmatpush1.bf16.msra.mxu0 %v398
    %424 = vmatprep.subr.bf16.mxu0 0
    %425 = vmatpush1.bf16.msra.mxu0 %v397
    %426 = vmatprep.subr.bf16.mxu0 0
    %427 = vmatpush1.bf16.msra.mxu0 %v396
    %428 = vmatprep.subr.bf16.mxu0 0
    %429 = vmatpush2.bf16.msra.mxu0 0
    %430 = vmatprep.subr.bf16.mxu0 0
    %431 = vmatpush2.bf16.msra.mxu0 0
    %432 = vmatprep.subr.bf16.mxu0 0
    %433 = vmatpush2.bf16.msra.mxu0 0
    %434 = vmatprep.subr.bf16.mxu0 0
    %435 = vmatpush2.bf16.msra.mxu0 0
    %436 = vmatprep.subr.bf16.mxu0 0
    %437 = vmatpush2.bf16.msra.mxu0 0
    %438 = vmatprep.subr.bf16.mxu0 0
    %439 = vmatpush2.bf16.msra.mxu0 0
    %440 = vmatprep.subr.bf16.mxu0 0
    %441 = vmatpush2.bf16.msra.mxu0 0
    %442 = vmatprep.subr.bf16.mxu0 0
    %443 = vmatpush2.bf16.msra.mxu0 0
    %444 = vmatprep.mubr.bf16.mxu0 0
    %445 = vmatmul.mubr.bf16.gmra.mxu0 %v242
    %v446 = vpop.f32.mrf.mxu0
    %v447 = vadd.f32 %v359, %v446
    %v448 = vpop.f32.mrf.mxu0
    %v449 = vpop.f32.mrf.mxu0
    %v450 = vpop.f32.mrf.mxu0
    %451 = vdwg.mxu0
    %v452 = vld [vmem:[%s2] sm:$0x1]
    %v454 = vlaneseq
    %v455 = vshrl.u32 %v454, 7
    %v456 = vsub.s32 0, %v455
    %v457 = vrot.slane %v452, %v456
    %v459 = vadd.f32 %v447, %v457
    %v460 = vxor.u32 %v459, 2147483648
    %v461 = vmul.f32 %v460, 1.442695
    %v462 = vpow.pop %v461
    %v463 = vadd.f32 %v462, 1.0
    %v464 = vrcp.pop %v463
    %v465 = vmul.f32 1.0, %v464
    %v466 = vmul.f32 %v459, %v465
    %v467 = vpack.c.bf16 %v466, %v466
    %v468 = vld [vmem:[%s3] sm:$0xf]
    %v469 = vld [vmem:[%s3 + $0x4] sm:$0xf]
    %v470 = vld [vmem:[%s3 + $0x8] sm:$0xf]
    %v471 = vld [vmem:[%s3 + $0xc] sm:$0xf]
    %v472 = vld [vmem:[%s4] sm:$0x1]
    %v474 = vlaneseq
    %v475 = vshrl.u32 %v474, 7
    %v476 = vsub.s32 0, %v475
    %v477 = vrot.slane %v472, %v476
    %v483 = vunpack.c.l.b16 %v468
    %v484 = vunpack.c.l.b16 %v469
    %v485 = vunpack.c.l.b16 %v470
    %v486 = vunpack.c.l.b16 %v471
    %v487 = vpack.c.b16 %v484, %v483
    %v488 = vpack.c.b16 %v486, %v485
    %vm491 = vcmask 261120
    %v493 = vsel %vm491, %v467, 0
    %495 = vmatprep.subr.bf16.mxu0 0
    %496 = vmatpush1.bf16.msra.mxu0 0
    %497 = vmatprep.subr.bf16.mxu0 0
    %498 = vmatpush1.bf16.msra.mxu0 0
    %499 = vmatprep.subr.bf16.mxu0 0
    %500 = vmatpush1.bf16.msra.mxu0 0
    %501 = vmatprep.subr.bf16.mxu0 0
    %502 = vmatpush1.bf16.msra.mxu0 0
    %503 = vmatprep.subr.bf16.mxu0 0
    %504 = vmatpush1.bf16.msra.mxu0 0
    %505 = vmatprep.subr.bf16.mxu0 0
    %506 = vmatpush1.bf16.msra.mxu0 0
    %507 = vmatprep.subr.bf16.mxu0 0
    %508 = vmatpush1.bf16.msra.mxu0 %v488
    %509 = vmatprep.subr.bf16.mxu0 0
    %510 = vmatpush1.bf16.msra.mxu0 %v487
    %511 = vmatprep.subr.bf16.mxu0 0
    %512 = vmatpush2.bf16.msra.mxu0 0
    %513 = vmatprep.subr.bf16.mxu0 0
    %514 = vmatpush2.bf16.msra.mxu0 0
    %515 = vmatprep.subr.bf16.mxu0 0
    %516 = vmatpush2.bf16.msra.mxu0 0
    %517 = vmatprep.subr.bf16.mxu0 0
    %518 = vmatpush2.bf16.msra.mxu0 0
    %519 = vmatprep.subr.bf16.mxu0 0
    %520 = vmatpush2.bf16.msra.mxu0 0
    %521 = vmatprep.subr.bf16.mxu0 0
    %522 = vmatpush2.bf16.msra.mxu0 0
    %523 = vmatprep.subr.bf16.mxu0 0
    %524 = vmatpush2.bf16.msra.mxu0 0
    %525 = vmatprep.subr.bf16.mxu0 0
    %526 = vmatpush2.bf16.msra.mxu0 0
    %527 = vmatprep.mubr.bf16.mxu0 0
    %528 = vmatmul.mubr.bf16.gmra.mxu0 %v493
    %v529 = vpop.f32.mrf.mxu0
    %v530 = vadd.f32 %v477, %v529
    %v531 = vpop.f32.mrf.mxu0
    %v532 = vpop.f32.mrf.mxu0
    %v533 = vpop.f32.mrf.mxu0
    %534 = vdwg.mxu0
    %535 = vst.msk [vmem:[#allocation2] sm:$0xff] %vm491, %v530
    // Predicated region
    $region22: #{tpu_custom_call.1} parent=1 // pred_check
      _
    $region23: #{tpu_custom_call.1} parent=1 // pred_check_branch
      %537 = sbr.rel (0) target = $region25
    $region24: #{tpu_custom_call.1} parent=1 // pred_region
      %s539 = ssub.s32 128, 128
      %540 = vsyncadd [#allocation3], %s539
      %s542 = sshll.u32 [#allocation2], 4
      %s543 = int_to_ptr.vmem [resolvable:$true] %s542
      %545 = dma.vmem_to_hbm [thread:$0]  %s543, 128, %s5, [#allocation3]
    $region25: #{tpu_custom_call.1} parent=1 // pred_fallthru
      _
    // Predicated region
    $region26: #{tpu_custom_call.1} parent=1 // pred_check
      _
    $region27: #{tpu_custom_call.1} parent=1 // pred_check_branch
      %547 = sbr.rel (0) target = $region29
    $region28: #{tpu_custom_call.1} parent=1 // pred_region
      %548 = dma.done [#allocation3], 128
    $region29: #{tpu_custom_call.1} parent=1 // pred_fallthru
      _
    %549 = vsyncpa [#allocation3], 1

</llo_original>
